<compile_context>
chip_gen: v6e
topology: v6e:2x2x1
jax: 0.10.0
libtpu: 0.0.40
codegen_flags: <defaults>
</compile_context>

<pallas_src>
import math
import functools

import jax
import jax.numpy as jnp
from jax.experimental import pallas as pl
from jax.experimental.pallas import tpu as pltpu


# ----------------------------------------------------------------------------
# helpers
# ----------------------------------------------------------------------------

def _round_up(x, m):
    return ((x + m - 1) // m) * m


def _pick_div(total, candidates):
    """Largest candidate tile size that divides `total` (candidates high->low)."""
    for c in candidates:
        if c <= total and total % c == 0:
            return c
    return total


def _vmem_config():
    """Generation-aware (vmem_limit_bytes, resident-path budget) in bytes.

    v5e/v6e have 128 MiB VMEM per TensorCore, v7x only 64 MiB.  Fall back to
    the conservative (v7x-safe) numbers if the hardware query is unavailable.
    """
    cap = 64 * 1024 * 1024
    try:
        cap = int(pltpu.get_tpu_info().vmem_capacity_bytes)
    except Exception:
        pass
    if cap >= 100 * 1024 * 1024:                 # v5e / v6e (128 MiB physical)
        return 96 * 1024 * 1024, 48 * 1024 * 1024
    return 32 * 1024 * 1024, 20 * 1024 * 1024    # v7x or unknown


_VMEM_LIMIT, _RESIDENT_BUDGET = _vmem_config()


def _resident_bytes(mp, fp, tm_row):
    """VMEM needed by the resident adj@support kernel (support single-buffered)."""
    return (mp * fp * 2              # support, bf16, Buffered(1)
            + 2 * tm_row * mp * 2    # adj row tile, bf16, double-buffered
            + 2 * tm_row * fp * 4    # out tile, f32, double-buffered
            + fp * 4)                # bias row, f32, Buffered(1)


# ----------------------------------------------------------------------------
# kernels
# ----------------------------------------------------------------------------

def _matmul_kernel(a_ref, b_ref, o_ref, acc_ref):
    """o = a @ b with f32 accumulator scratch; K-reduction on grid axis 2."""
    @pl.when(pl.program_id(2) == 0)
    def _():
        acc_ref[...] = jnp.zeros_like(acc_ref)

    acc_ref[...] += jnp.dot(a_ref[...], b_ref[...],
                            preferred_element_type=jnp.float32)

    @pl.when(pl.program_id(2) == pl.num_programs(2) - 1)
    def _():
        o_ref[...] = acc_ref[...].astype(o_ref.dtype)


def _matmul_bias_kernel(a_ref, b_ref, bias_ref, o_ref):
    """o(f32) = a @ b + bias, accumulating directly into the VMEM-resident
    output block.  Only valid while the K axis stays LAST in the grid and the
    output index_map is constant in k."""
    @pl.when(pl.program_id(2) == 0)
    def _():
        o_ref[...] = jnp.zeros_like(o_ref)

    o_ref[...] += jnp.dot(a_ref[...], b_ref[...],
                          preferred_element_type=jnp.float32)

    @pl.when(pl.program_id(2) == pl.num_programs(2) - 1)
    def _():
        o_ref[...] += bias_ref[...]


def _adj_resident_kernel(adj_ref, support_ref, bias_ref, o_ref):
    """One row-tile of out = adj @ support + bias; support fully VMEM-resident."""
    o_ref[...] = (jnp.dot(adj_ref[...], support_ref[...],
                          preferred_element_type=jnp.float32)
                  + bias_ref[...]).astype(o_ref.dtype)


# ----------------------------------------------------------------------------
# pallas_call wrappers (operate on already-padded operands)
# ----------------------------------------------------------------------------

def _tiled_matmul(a, b, *, out_dtype, tm, tn, tk):
    M, K = a.shape
    _, N = b.shape
    grid = (M // tm, N // tn, K // tk)
    cost = pl.CostEstimate(
        flops=2 * M * N * K, transcendentals=0,
        bytes_accessed=(a.size * a.dtype.itemsize + b.size * b.dtype.itemsize
                        + M * N * jnp.dtype(out_dtype).itemsize))
    return pl.pallas_call(
        _matmul_kernel,
        out_shape=jax.ShapeDtypeStruct((M, N), out_dtype),
        grid_spec=pltpu.PrefetchScalarGridSpec(
            num_scalar_prefetch=0,
            grid=grid,
            in_specs=[pl.BlockSpec((tm, tk), lambda i, j, k: (i, k)),
                      pl.BlockSpec((tk, tn), lambda i, j, k: (k, j))],
            out_specs=pl.BlockSpec((tm, tn), lambda i, j, k: (i, j)),
            scratch_shapes=[pltpu.VMEM((tm, tn), jnp.float32)]),
        compiler_params=pltpu.CompilerParams(
            dimension_semantics=("parallel", "parallel", "arbitrary"),
            vmem_limit_bytes=_VMEM_LIMIT),
        cost_estimate=cost,
    )(a, b)


def _tiled_matmul_bias(a, b, bias_row, *, tm, tn, tk):
    """Large-graph fallback for adj @ support + bias (K-last reduction grid)."""
    M, K = a.shape
    _, N = b.shape
    grid = (M // tm, N // tn, K // tk)
    cost = pl.CostEstimate(
        flops=2 * M * N * K, transcendentals=0,
        bytes_accessed=(a.size * a.dtype.itemsize + b.size * b.dtype.itemsize
                        + M * N * 4 + bias_row.size * 4))
    return pl.pallas_call(
        _matmul_bias_kernel,
        out_shape=jax.ShapeDtypeStruct((M, N), jnp.float32),
        grid_spec=pltpu.PrefetchScalarGridSpec(
            num_scalar_prefetch=0,
            grid=grid,
            in_specs=[pl.BlockSpec((tm, tk), lambda i, j, k: (i, k)),
                      pl.BlockSpec((tk, tn), lambda i, j, k: (k, j)),
                      pl.BlockSpec((1, tn), lambda i, j, k: (0, j))],
            out_specs=pl.BlockSpec((tm, tn), lambda i, j, k: (i, j))),
        compiler_params=pltpu.CompilerParams(
            dimension_semantics=("parallel", "parallel", "arbitrary"),
            vmem_limit_bytes=_VMEM_LIMIT),
        cost_estimate=cost,
    )(a, b, bias_row)


def _resident_matmul_bias(adj_p, support_p, bias_row, *, tm_row):
    """adj @ support + bias with support fully VMEM-resident; row axis parallel."""
    Mp = adj_p.shape[0]
    Fp = support_p.shape[1]
    grid = (Mp // tm_row,)
    cost = pl.CostEstimate(
        flops=2 * Mp * Mp * Fp, transcendentals=0,
        bytes_accessed=(adj_p.size * 2 + support_p.size * 2
                        + Mp * Fp * 4 + bias_row.size * 4))
    return pl.pallas_call(
        _adj_resident_kernel,
        out_shape=jax.ShapeDtypeStruct((Mp, Fp), jnp.float32),
        grid_spec=pltpu.PrefetchScalarGridSpec(
            num_scalar_prefetch=0,
            grid=grid,
            in_specs=[
                # adj row tile streams from HBM (default double-buffered; on v7x
                # sweeping pipeline_mode=pl.Buffered(3) here is worth measuring).
                pl.BlockSpec((tm_row, Mp), lambda i: (i, 0)),
                # support + bias have constant index_maps -> DMA'd once; single
                # buffer them so they don't burn VMEM on a second copy.
                pl.BlockSpec((Mp, Fp), lambda i: (0, 0),
                             pipeline_mode=pl.Buffered(1)),
                pl.BlockSpec((1, Fp), lambda i: (0, 0),
                             pipeline_mode=pl.Buffered(1)),
            ],
            out_specs=pl.BlockSpec((tm_row, Fp), lambda i: (i, 0))),
        compiler_params=pltpu.CompilerParams(
            # Row tiles are independent -> megacore-splittable on v7x.
            dimension_semantics=("parallel",),
            vmem_limit_bytes=_VMEM_LIMIT),
        cost_estimate=cost,
    )(adj_p, support_p, bias_row)


# ----------------------------------------------------------------------------
# public API
# ----------------------------------------------------------------------------

def prepare_adj(adj, align=512):
    """Optional one-time preprocessing: cast adj to bf16 and zero-pad to a
    multiple of `align`.  graph_convolution_forward detects a prepared
    adjacency and skips the per-call N^2 cast + pad (which otherwise adds
    ~3-4x extra HBM traffic relative to the kernel's own adj reads)."""
    n = adj.shape[0]
    n_p = _round_up(n, align)
    return jnp.pad(adj.astype(jnp.bfloat16), ((0, n_p - n), (0, n_p - n)))


@functools.partial(jax.jit, static_argnames=("force_unfused",))
def graph_convolution_forward(x, adj, weight, bias=None, *, force_unfused=False):
    """GCN layer forward: adj @ (x @ weight) + bias, f32 output of shape (N, F_out).

    `adj` is either the raw (N, N) float matrix or the output of prepare_adj()
    (bf16, zero-padded to a multiple of 128)."""
    N, F_in = x.shape
    F_out = weight.shape[1]
    N_adj = adj.shape[0]

    Fp = _round_up(F_out, 128)
    Kp = _round_up(F_in, 128)

    adj_prepared = (adj.dtype == jnp.bfloat16 and N_adj >= N and N_adj % 128 == 0)

    # ---- choose path / row padding (trace-time Python on static shapes) ----
    Mp_res = N_adj if adj_prepared else _round_up(N, 128)
    tm_row = None
    if not force_unfused:
        for cand in (512, 256, 128):
            if (cand <= Mp_res and Mp_res % cand == 0
                    and _resident_bytes(Mp_res, Fp, cand) <= _RESIDENT_BUDGET):
                tm_row = cand
                break
    use_resident = tm_row is not None

    if use_resident:
        Mp = Mp_res
    else:
        # Big streaming tiles want M padded to 512 (unless adj was pre-padded).
        Mp = N_adj if adj_prepared else _round_up(N, 512)

    # ---- pad operands once; padded support feeds stage 2 directly and only
    #      the final output is sliced.  Zero padding is inert for matmul+bias. ----
    x_bf = jnp.pad(x.astype(jnp.bfloat16), ((0, Mp - N), (0, Kp - F_in)))
    w_bf = jnp.pad(weight.astype(jnp.bfloat16), ((0, Kp - F_in), (0, Fp - F_out)))
    adj_bf = adj if adj_prepared else jnp.pad(
        adj.astype(jnp.bfloat16), ((0, Mp - N), (0, Mp - N)))
    b_f32 = (bias if bias is not None
             else jnp.zeros((F_out,), jnp.float32)).astype(jnp.float32)
    bias_row = jnp.pad(b_f32, (0, Fp - F_out)).reshape(1, Fp)

    # ---- stage 1: support = x @ w (bf16 out, f32 MXU accumulation) ----
    tm1 = _pick_div(Mp, (512, 256, 128))
    tn1 = _pick_div(Fp, (256, 128))
    tk1 = _pick_div(Kp, (1024, 512, 256, 128))
    support = _tiled_matmul(x_bf, w_bf, out_dtype=jnp.bfloat16,
                            tm=tm1, tn=tn1, tk=tk1)

    # ---- stage 2: out = adj @ support + bias ----
    if use_resident:
        out_p = _resident_matmul_bias(adj_bf, support, bias_row, tm_row=tm_row)
    else:
        tm2 = _pick_div(Mp, (512, 256, 128))
        tn2 = _pick_div(Fp, (256, 128))
        tk2 = _pick_div(Mp, (2048, 1024, 512, 256, 128))
        out_p = _tiled_matmul_bias(adj_bf, support, bias_row,
                                   tm=tm2, tn=tn2, tk=tk2)

    return out_p[:N, :F_out]


def init_gcn_params(key, in_features, out_features, bias=True):
    """Matches GraphConvolution.reset_parameters: U(-stdv, stdv), stdv=1/sqrt(F_out)."""
    stdv = 1.0 / math.sqrt(out_features)
    k_w, k_b = jax.random.split(key)
    weight = jax.random.uniform(k_w, (in_features, out_features),
                                dtype=jnp.float32, minval=-stdv, maxval=stdv)
    b = None
    if bias:
        b = jax.random.uniform(k_b, (out_features,),
                               dtype=jnp.float32, minval=-stdv, maxval=stdv)
    return weight, b


if __name__ == "__main__":
    key = jax.random.PRNGKey(0)
    k_x, k_adj, k_p = jax.random.split(key, 3)

    # Small, deliberately non-multiple-of-128 shapes to exercise padding.
    N = 200
    in_features = 96
    out_features = 80

    x = jax.random.normal(k_x, (N, in_features), dtype=jnp.float32)
    adj_raw = jax.random.uniform(k_adj, (N, N), dtype=jnp.float32)
    adj = adj_raw / jnp.sum(adj_raw, axis=1, keepdims=True)   # row-normalized DAD stand-in

    weight, bias = init_gcn_params(k_p, in_features, out_features, bias=True)

    ref = adj @ (x @ weight) + bias

    # 1) raw adj (cast + pad inside the call) -> resident path.
    out_resident = jax.block_until_ready(
        graph_convolution_forward(x, adj, weight, bias))
    # 2) pre-prepared adj (bf16, padded once at setup) -> skips per-call N^2 cast/pad.
    adj_prep = jax.block_until_ready(prepare_adj(adj))
    out_prepared = jax.block_until_ready(
        graph_convolution_forward(x, adj_prep, weight, bias))
    # 3) large-graph fallback (tiled K-last reduction).
    out_tiled = jax.block_until_ready(
        graph_convolution_forward(x, adj, weight, bias, force_unfused=True))

    for name, out in (("resident", out_resident),
                      ("prepared", out_prepared),
                      ("tiled", out_tiled)):
        assert out.shape == (N, out_features), name
        # bf16 operands + f32 accumulation -> looser tolerance than pure f32.
        assert jnp.allclose(out, ref, atol=5e-2, rtol=5e-2), f"{name} mismatch vs reference"

    print("KERNEL_OK")
</pallas_src>

<mosaic_0001>
module attributes {stable_mosaic.version = 11 : i64} {
  func.func @_matmul_kernel(%arg0: i32, %arg1: i32, %arg2: i32, %arg3: memref<256x128xbf16, #tpu.memory_space<vmem>>, %arg4: memref<128x128xbf16, #tpu.memory_space<vmem>>, %arg5: memref<256x128xbf16, #tpu.memory_space<vmem>>, %arg6: memref<256x128xf32, #tpu.memory_space<vmem>>) attributes {dimension_semantics = [#tpu.dimension_semantics<parallel>, #tpu.dimension_semantics<parallel>, #tpu.dimension_semantics<arbitrary>], iteration_bounds = array<i64: 1, 1, 1>, scalar_prefetch = 0 : i64, scratch_operands = 1 : i64, tpu.core_type = #tpu.core_type<tc>, window_params = [{transform_indices = @transform_0, window_bounds = array<i64: 256, 128>}, {transform_indices = @transform_1, window_bounds = array<i64: 128, 128>}, {transform_indices = @transform_2, window_bounds = array<i64: 256, 128>}]} {
    %c0_i32 = arith.constant 0 : i32
    %0 = arith.cmpi eq, %arg2, %c0_i32 : i32
    %1 = arith.extui %0 : i1 to i32
    %c0_i32_0 = arith.constant 0 : i32
    %2 = arith.cmpi ne, %1, %c0_i32_0 : i32
    scf.if %2 {
      %cst_10 = arith.constant 0.000000e+00 : f32
      %12 = vector.broadcast %cst_10 : f32 to vector<256x128xf32>
      %c0_11 = arith.constant 0 : index
      %c0_12 = arith.constant 0 : index
      %13 = vector.load %arg6[%c0_11, %c0_12] : memref<256x128xf32, #tpu.memory_space<vmem>>, vector<256x128xf32>
      tpu.vector_store %arg6[%c0_11, %c0_12], %12 {strides = array<i32>} : memref<256x128xf32, #tpu.memory_space<vmem>>, vector<256x128xf32>,
    } else {
    }
    %c0 = arith.constant 0 : index
    %c0_1 = arith.constant 0 : index
    %3 = vector.load %arg6[%c0, %c0_1] : memref<256x128xf32, #tpu.memory_space<vmem>>, vector<256x128xf32>
    %c0_2 = arith.constant 0 : index
    %c0_3 = arith.constant 0 : index
    %4 = vector.load %arg3[%c0_2, %c0_3] : memref<256x128xbf16, #tpu.memory_space<vmem>>, vector<256x128xbf16>
    %c0_4 = arith.constant 0 : index
    %c0_5 = arith.constant 0 : index
    %5 = vector.load %arg4[%c0_4, %c0_5] : memref<128x128xbf16, #tpu.memory_space<vmem>>, vector<128x128xbf16>
    %cst = arith.constant dense<0.000000e+00> : vector<256x128xf32>
    %6 = tpu.matmul %4, %5, %cst {dimension_numbers = #tpu.dot_dimension_numbers<[1], [0], [0], [1], [0, 0, 1, 1], [], []>} : vector<256x128xbf16>, vector<128x128xbf16>, vector<256x128xf32> -> vector<256x128xf32>
    %7 = arith.addf %3, %6 : vector<256x128xf32>
    %c0_6 = arith.constant 0 : index
    %c0_7 = arith.constant 0 : index
    %8 = vector.load %arg6[%c0_6, %c0_7] : memref<256x128xf32, #tpu.memory_space<vmem>>, vector<256x128xf32>
    tpu.vector_store %arg6[%c0_6, %c0_7], %7 {strides = array<i32>} : memref<256x128xf32, #tpu.memory_space<vmem>>, vector<256x128xf32>,
    %c0_i32_8 = arith.constant 0 : i32
    %9 = arith.cmpi eq, %arg2, %c0_i32_8 : i32
    %10 = arith.extui %9 : i1 to i32
    %c0_i32_9 = arith.constant 0 : i32
    %11 = arith.cmpi ne, %10, %c0_i32_9 : i32
    scf.if %11 {
      %c0_10 = arith.constant 0 : index
      %c0_11 = arith.constant 0 : index
      %12 = vector.load %arg6[%c0_10, %c0_11] : memref<256x128xf32, #tpu.memory_space<vmem>>, vector<256x128xf32>
      %13 = arith.truncf %12 : vector<256x128xf32> to vector<256x128xbf16>
      %c0_12 = arith.constant 0 : index
      %c0_13 = arith.constant 0 : index
      %14 = vector.load %arg5[%c0_12, %c0_13] : memref<256x128xbf16, #tpu.memory_space<vmem>>, vector<256x128xbf16>
      tpu.vector_store %arg5[%c0_12, %c0_13], %13 {strides = array<i32>} : memref<256x128xbf16, #tpu.memory_space<vmem>>, vector<256x128xbf16>,
    } else {
    }
    return
  }
  func.func @transform_0(%arg0: i32, %arg1: i32, %arg2: i32) -> (i32, i32) {
    %c0_i32 = arith.constant 0 : i32
    return %arg0, %arg2 : i32, i32
  }
  func.func @transform_1(%arg0: i32, %arg1: i32, %arg2: i32) -> (i32, i32) {
    %c0_i32 = arith.constant 0 : i32
    return %arg2, %arg1 : i32, i32
  }
  func.func @transform_2(%arg0: i32, %arg1: i32, %arg2: i32) -> (i32, i32) {
    %c0_i32 = arith.constant 0 : i32
    return %arg0, %arg1 : i32, i32
  }
}

module attributes {stable_mosaic.version = 11 : i64} {
  func.func @_adj_resident_kernel(%arg0: i32, %arg1: memref<256x256xbf16, #tpu.memory_space<vmem>>, %arg2: memref<256x128xbf16, #tpu.memory_space<vmem>>, %arg3: memref<1x128xf32, #tpu.memory_space<vmem>>, %arg4: memref<256x128xf32, #tpu.memory_space<vmem>>) attributes {dimension_semantics = [#tpu.dimension_semantics<parallel>], iteration_bounds = array<i64: 1>, scalar_prefetch = 0 : i64, scratch_operands = 0 : i64, tpu.core_type = #tpu.core_type<tc>, window_params = [{transform_indices = @transform_0, window_bounds = array<i64: 256, 256>}, {pipeline_mode = #tpu.pipeline_mode<synchronous>, transform_indices = @transform_1, window_bounds = array<i64: 256, 128>}, {pipeline_mode = #tpu.pipeline_mode<synchronous>, transform_indices = @transform_2, window_bounds = array<i64: 1, 128>}, {transform_indices = @transform_3, window_bounds = array<i64: 256, 128>}]} {
    %c0 = arith.constant 0 : index
    %c0_0 = arith.constant 0 : index
    %0 = vector.load %arg1[%c0, %c0_0] : memref<256x256xbf16, #tpu.memory_space<vmem>>, vector<256x256xbf16>
    %c0_1 = arith.constant 0 : index
    %c0_2 = arith.constant 0 : index
    %1 = vector.load %arg2[%c0_1, %c0_2] : memref<256x128xbf16, #tpu.memory_space<vmem>>, vector<256x128xbf16>
    %cst = arith.constant dense<0.000000e+00> : vector<256x128xf32>
    %2 = tpu.matmul %0, %1, %cst {dimension_numbers = #tpu.dot_dimension_numbers<[1], [0], [0], [1], [0, 0, 1, 1], [], []>} : vector<256x256xbf16>, vector<256x128xbf16>, vector<256x128xf32> -> vector<256x128xf32>
    %c0_3 = arith.constant 0 : index
    %c0_4 = arith.constant 0 : index
    %3 = vector.load %arg3[%c0_3, %c0_4] : memref<1x128xf32, #tpu.memory_space<vmem>>, vector<1x128xf32>
    %4 = vector.broadcast %3 : vector<1x128xf32> to vector<256x128xf32>
    %5 = arith.addf %2, %4 : vector<256x128xf32>
    %c0_5 = arith.constant 0 : index
    %c0_6 = arith.constant 0 : index
    %6 = vector.load %arg4[%c0_5, %c0_6] : memref<256x128xf32, #tpu.memory_space<vmem>>, vector<256x128xf32>
    tpu.vector_store %arg4[%c0_5, %c0_6], %5 {strides = array<i32>} : memref<256x128xf32, #tpu.memory_space<vmem>>, vector<256x128xf32>,
    return
  }
  func.func @transform_0(%arg0: i32) -> (i32, i32) {
    %c0_i32 = arith.constant 0 : i32
    %c0_i32_0 = arith.constant 0 : i32
    return %arg0, %c0_i32 : i32, i32
  }
  func.func @transform_1(%arg0: i32) -> (i32, i32) {
    %c0_i32 = arith.constant 0 : i32
    %c0_i32_0 = arith.constant 0 : i32
    %c0_i32_1 = arith.constant 0 : i32
    return %c0_i32, %c0_i32_0 : i32, i32
  }
  func.func @transform_2(%arg0: i32) -> (i32, i32) {
    %c0_i32 = arith.constant 0 : i32
    %c0_i32_0 = arith.constant 0 : i32
    %c0_i32_1 = arith.constant 0 : i32
    return %c0_i32, %c0_i32_0 : i32, i32
  }
  func.func @transform_3(%arg0: i32) -> (i32, i32) {
    %c0_i32 = arith.constant 0 : i32
    %c0_i32_0 = arith.constant 0 : i32
    return %arg0, %c0_i32 : i32, i32
  }
}

</mosaic_0001>

<llo_original>
// kernel: graph_convolution_forward.3
$region0: #{graph_convolution_forward.3}
  #allocation0 [shape = 'u32[]', space=smem, size = 0x4, offset = 0x4, fixed_abs, tag = 'smem constant byte address 0x4 - core index']
  #allocation1 [shape = 'u32[144,128]{1,0:T(1,128)}', space=vmem, size = 0x12000, scoped, tag = 'internal scratch']
  %s0 = inlined_call_operand.vmem [shape: bf16[256,256], index: 0, kind: input, shape index: {}]
  %s1 = inlined_call_operand.vmem [shape: bf16[256,128], index: 1, kind: input, shape index: {}]
  %s2 = inlined_call_operand.vmem [shape: f32[1,128], index: 2, kind: input, shape index: {}]
  %s3 = inlined_call_operand.vmem [shape: f32[256,128], index: 3, kind: output, shape index: {}]
  %s4 = sld [smem:[#allocation0]]
  $region22: #{graph_convolution_forward.3} parent=0
    _
  %s6 = ssub.s32 1, %s4
  %s7 = scalar_select 0, %s6, %s4
  // Predicated region
  $region2: #{graph_convolution_forward.3} parent=0 // pred_check
    _
  $region3: #{graph_convolution_forward.3} parent=0 // pred_check_branch
    %9 = sbr.rel (0) target = $region5
  $region4: #{graph_convolution_forward.3} parent=0 // pred_region
    _
  $region5: #{graph_convolution_forward.3} parent=0 // pred_fallthru
    _
  // Predicated region
  $region6: #{graph_convolution_forward.3} parent=0 // pred_check
    _
  $region7: #{graph_convolution_forward.3} parent=0 // pred_check_branch
    %11 = sbr.rel (0) target = $region9
  $region8: #{graph_convolution_forward.3} parent=0 // pred_region
    _
  $region9: #{graph_convolution_forward.3} parent=0 // pred_fallthru
    _
  // Predicated region
  $region10: #{graph_convolution_forward.3} parent=0 // pred_check
    _
  $region11: #{graph_convolution_forward.3} parent=0 // pred_check_branch
    %13 = sbr.rel (0) target = $region13
  $region12: #{graph_convolution_forward.3} parent=0 // pred_region
    _
  $region13: #{graph_convolution_forward.3} parent=0 // pred_fallthru
    _
  %v15 = vld [vmem:[%s0] sm:$0xff]
  %v16 = vld [vmem:[%s0 + $0x8] sm:$0xff]
  %v17 = vld [vmem:[%s0 + $0x10] sm:$0xff]
  %v18 = vld [vmem:[%s0 + $0x18] sm:$0xff]
  %v19 = vld [vmem:[%s0 + $0x20] sm:$0xff]
  %v20 = vld [vmem:[%s0 + $0x28] sm:$0xff]
  %v21 = vld [vmem:[%s0 + $0x30] sm:$0xff]
  %v22 = vld [vmem:[%s0 + $0x38] sm:$0xff]
  %v23 = vld [vmem:[%s0 + $0x40] sm:$0xff]
  %v24 = vld [vmem:[%s0 + $0x48] sm:$0xff]
  %v25 = vld [vmem:[%s0 + $0x50] sm:$0xff]
  %v26 = vld [vmem:[%s0 + $0x58] sm:$0xff]
  %v27 = vld [vmem:[%s0 + $0x60] sm:$0xff]
  %v28 = vld [vmem:[%s0 + $0x68] sm:$0xff]
  %v29 = vld [vmem:[%s0 + $0x70] sm:$0xff]
  %v30 = vld [vmem:[%s0 + $0x78] sm:$0xff]
  %v31 = vld [vmem:[%s0 + $0x80] sm:$0xff]
  %v32 = vld [vmem:[%s0 + $0x88] sm:$0xff]
  %v33 = vld [vmem:[%s0 + $0x90] sm:$0xff]
  %v34 = vld [vmem:[%s0 + $0x98] sm:$0xff]
  %v35 = vld [vmem:[%s0 + $0xa0] sm:$0xff]
  %v36 = vld [vmem:[%s0 + $0xa8] sm:$0xff]
  %v37 = vld [vmem:[%s0 + $0xb0] sm:$0xff]
  %v38 = vld [vmem:[%s0 + $0xb8] sm:$0xff]
  %v39 = vld [vmem:[%s0 + $0xc0] sm:$0xff]
  %v40 = vld [vmem:[%s0 + $0xc8] sm:$0xff]
  %v41 = vld [vmem:[%s0 + $0xd0] sm:$0xff]
  %v42 = vld [vmem:[%s0 + $0xd8] sm:$0xff]
  %v43 = vld [vmem:[%s0 + $0xe0] sm:$0xff]
  %v44 = vld [vmem:[%s0 + $0xe8] sm:$0xff]
  %v45 = vld [vmem:[%s0 + $0xf0] sm:$0xff]
  %v46 = vld [vmem:[%s0 + $0xf8] sm:$0xff]
  %v47 = vld [vmem:[%s1] sm:$0xf]
  %v48 = vld [vmem:[%s1 + $0x4] sm:$0xf]
  %v49 = vld [vmem:[%s1 + $0x8] sm:$0xf]
  %v50 = vld [vmem:[%s1 + $0xc] sm:$0xf]
  %v51 = vld [vmem:[%s1 + $0x10] sm:$0xf]
  %v52 = vld [vmem:[%s1 + $0x14] sm:$0xf]
  %v53 = vld [vmem:[%s1 + $0x18] sm:$0xf]
  %v54 = vld [vmem:[%s1 + $0x1c] sm:$0xf]
  %v55 = vld [vmem:[%s1 + $0x20] sm:$0xf]
  %v56 = vld [vmem:[%s1 + $0x24] sm:$0xf]
  %v57 = vld [vmem:[%s1 + $0x28] sm:$0xf]
  %v58 = vld [vmem:[%s1 + $0x2c] sm:$0xf]
  %v59 = vld [vmem:[%s1 + $0x30] sm:$0xf]
  %v60 = vld [vmem:[%s1 + $0x34] sm:$0xf]
  %v61 = vld [vmem:[%s1 + $0x38] sm:$0xf]
  %v62 = vld [vmem:[%s1 + $0x3c] sm:$0xf]
  %v63 = vld [vmem:[%s1 + $0x40] sm:$0xf]
  %v64 = vld [vmem:[%s1 + $0x44] sm:$0xf]
  %v65 = vld [vmem:[%s1 + $0x48] sm:$0xf]
  %v66 = vld [vmem:[%s1 + $0x4c] sm:$0xf]
  %v67 = vld [vmem:[%s1 + $0x50] sm:$0xf]
  %v68 = vld [vmem:[%s1 + $0x54] sm:$0xf]
  %v69 = vld [vmem:[%s1 + $0x58] sm:$0xf]
  %v70 = vld [vmem:[%s1 + $0x5c] sm:$0xf]
  %v71 = vld [vmem:[%s1 + $0x60] sm:$0xf]
  %v72 = vld [vmem:[%s1 + $0x64] sm:$0xf]
  %v73 = vld [vmem:[%s1 + $0x68] sm:$0xf]
  %v74 = vld [vmem:[%s1 + $0x6c] sm:$0xf]
  %v75 = vld [vmem:[%s1 + $0x70] sm:$0xf]
  %v76 = vld [vmem:[%s1 + $0x74] sm:$0xf]
  %v77 = vld [vmem:[%s1 + $0x78] sm:$0xf]
  %v78 = vld [vmem:[%s1 + $0x7c] sm:$0xf]
  %v79 = vld [vmem:[%s2] sm:$0x1]
  %v81 = vlaneseq
  %v82 = vshrl.u32 %v81, 7
  %v83 = vsub.s32 0, %v82
  %v84 = vrot.slane %v79, %v83
  %v118 = vunpack.c.l.b16 %v15
  %v119 = vunpack.c.h.b16 %v15
  %v120 = vunpack.c.l.b16 %v16
  %v121 = vunpack.c.h.b16 %v16
  %v122 = vunpack.c.l.b16 %v17
  %v123 = vunpack.c.h.b16 %v17
  %v124 = vunpack.c.l.b16 %v18
  %v125 = vunpack.c.h.b16 %v18
  %v126 = vunpack.c.l.b16 %v19
  %v127 = vunpack.c.h.b16 %v19
  %v128 = vunpack.c.l.b16 %v20
  %v129 = vunpack.c.h.b16 %v20
  %v130 = vunpack.c.l.b16 %v21
  %v131 = vunpack.c.h.b16 %v21
  %v132 = vunpack.c.l.b16 %v22
  %v133 = vunpack.c.h.b16 %v22
  %v134 = vunpack.c.l.b16 %v23
  %v135 = vunpack.c.h.b16 %v23
  %v136 = vunpack.c.l.b16 %v24
  %v137 = vunpack.c.h.b16 %v24
  %v138 = vunpack.c.l.b16 %v25
  %v139 = vunpack.c.h.b16 %v25
  %v140 = vunpack.c.l.b16 %v26
  %v141 = vunpack.c.h.b16 %v26
  %v142 = vunpack.c.l.b16 %v27
  %v143 = vunpack.c.h.b16 %v27
  %v144 = vunpack.c.l.b16 %v28
  %v145 = vunpack.c.h.b16 %v28
  %v146 = vunpack.c.l.b16 %v29
  %v147 = vunpack.c.h.b16 %v29
  %v148 = vunpack.c.l.b16 %v30
  %v149 = vunpack.c.h.b16 %v30
  %v150 = vunpack.c.l.b16 %v31
  %v151 = vunpack.c.h.b16 %v31
  %v152 = vunpack.c.l.b16 %v32
  %v153 = vunpack.c.h.b16 %v32
  %v154 = vunpack.c.l.b16 %v33
  %v155 = vunpack.c.h.b16 %v33
  %v156 = vunpack.c.l.b16 %v34
  %v157 = vunpack.c.h.b16 %v34
  %v158 = vunpack.c.l.b16 %v35
  %v159 = vunpack.c.h.b16 %v35
  %v160 = vunpack.c.l.b16 %v36
  %v161 = vunpack.c.h.b16 %v36
  %v162 = vunpack.c.l.b16 %v37
  %v163 = vunpack.c.h.b16 %v37
  %v164 = vunpack.c.l.b16 %v38
  %v165 = vunpack.c.h.b16 %v38
  %v166 = vunpack.c.l.b16 %v39
  %v167 = vunpack.c.h.b16 %v39
  %v168 = vunpack.c.l.b16 %v40
  %v169 = vunpack.c.h.b16 %v40
  %v170 = vunpack.c.l.b16 %v41
  %v171 = vunpack.c.h.b16 %v41
  %v172 = vunpack.c.l.b16 %v42
  %v173 = vunpack.c.h.b16 %v42
  %v174 = vunpack.c.l.b16 %v43
  %v175 = vunpack.c.h.b16 %v43
  %v176 = vunpack.c.l.b16 %v44
  %v177 = vunpack.c.h.b16 %v44
  %v178 = vunpack.c.l.b16 %v45
  %v179 = vunpack.c.h.b16 %v45
  %v180 = vunpack.c.l.b16 %v46
  %v181 = vunpack.c.h.b16 %v46
  %v182 = vpack.c.b16 %v120, %v118
  %v183 = vpack.c.b16 %v121, %v119
  %v184 = vpack.c.b16 %v124, %v122
  %v185 = vpack.c.b16 %v125, %v123
  %v186 = vpack.c.b16 %v128, %v126
  %v187 = vpack.c.b16 %v129, %v127
  %v188 = vpack.c.b16 %v132, %v130
  %v189 = vpack.c.b16 %v133, %v131
  %v190 = vpack.c.b16 %v136, %v134
  %v191 = vpack.c.b16 %v137, %v135
  %v192 = vpack.c.b16 %v140, %v138
  %v193 = vpack.c.b16 %v141, %v139
  %v194 = vpack.c.b16 %v144, %v142
  %v195 = vpack.c.b16 %v145, %v143
  %v196 = vpack.c.b16 %v148, %v146
  %v197 = vpack.c.b16 %v149, %v147
  %v198 = vpack.c.b16 %v152, %v150
  %v199 = vpack.c.b16 %v153, %v151
  %v200 = vpack.c.b16 %v156, %v154
  %v201 = vpack.c.b16 %v157, %v155
  %v202 = vpack.c.b16 %v160, %v158
  %v203 = vpack.c.b16 %v161, %v159
  %v204 = vpack.c.b16 %v164, %v162
  %v205 = vpack.c.b16 %v165, %v163
  %v206 = vpack.c.b16 %v168, %v166
  %v207 = vpack.c.b16 %v169, %v167
  %v208 = vpack.c.b16 %v172, %v170
  %v209 = vpack.c.b16 %v173, %v171
  %v210 = vpack.c.b16 %v176, %v174
  %v211 = vpack.c.b16 %v177, %v175
  %v212 = vpack.c.b16 %v180, %v178
  %v213 = vpack.c.b16 %v181, %v179
  %v278 = vunpack.c.l.b16 %v47
  %v279 = vunpack.c.l.b16 %v48
  %v280 = vunpack.c.l.b16 %v49
  %v281 = vunpack.c.l.b16 %v50
  %v282 = vunpack.c.l.b16 %v51
  %v283 = vunpack.c.l.b16 %v52
  %v284 = vunpack.c.l.b16 %v53
  %v285 = vunpack.c.l.b16 %v54
  %v286 = vunpack.c.l.b16 %v55
  %v287 = vunpack.c.l.b16 %v56
  %v288 = vunpack.c.l.b16 %v57
  %v289 = vunpack.c.l.b16 %v58
  %v290 = vunpack.c.l.b16 %v59
  %v291 = vunpack.c.l.b16 %v60
  %v292 = vunpack.c.l.b16 %v61
  %v293 = vunpack.c.l.b16 %v62
  %v294 = vunpack.c.l.b16 %v63
  %v295 = vunpack.c.l.b16 %v64
  %v296 = vunpack.c.l.b16 %v65
  %v297 = vunpack.c.l.b16 %v66
  %v298 = vunpack.c.l.b16 %v67
  %v299 = vunpack.c.l.b16 %v68
  %v300 = vunpack.c.l.b16 %v69
  %v301 = vunpack.c.l.b16 %v70
  %v302 = vunpack.c.l.b16 %v71
  %v303 = vunpack.c.l.b16 %v72
  %v304 = vunpack.c.l.b16 %v73
  %v305 = vunpack.c.l.b16 %v74
  %v306 = vunpack.c.l.b16 %v75
  %v307 = vunpack.c.l.b16 %v76
  %v308 = vunpack.c.l.b16 %v77
  %v309 = vunpack.c.l.b16 %v78
  %v310 = vpack.c.b16 %v279, %v278
  %v311 = vpack.c.b16 %v281, %v280
  %v312 = vpack.c.b16 %v283, %v282
  %v313 = vpack.c.b16 %v285, %v284
  %v314 = vpack.c.b16 %v287, %v286
  %v315 = vpack.c.b16 %v289, %v288
  %v316 = vpack.c.b16 %v291, %v290
  %v317 = vpack.c.b16 %v293, %v292
  %v318 = vpack.c.b16 %v295, %v294
  %v319 = vpack.c.b16 %v297, %v296
  %v320 = vpack.c.b16 %v299, %v298
  %v321 = vpack.c.b16 %v301, %v300
  %v322 = vpack.c.b16 %v303, %v302
  %v323 = vpack.c.b16 %v305, %v304
  %v324 = vpack.c.b16 %v307, %v306
  %v325 = vpack.c.b16 %v309, %v308
  %342 = vmatprep.subr.bf16.mxu0 0
  %343 = vmatpush1.bf16.msra.mxu0 %v317
  %344 = vmatprep.subr.bf16.mxu0 0
  %345 = vmatpush1.bf16.msra.mxu0 %v316
  %346 = vmatprep.subr.bf16.mxu0 0
  %347 = vmatpush1.bf16.msra.mxu0 %v315
  %348 = vmatprep.subr.bf16.mxu0 0
  %349 = vmatpush1.bf16.msra.mxu0 %v314
  %350 = vmatprep.subr.bf16.mxu0 0
  %351 = vmatpush1.bf16.msra.mxu0 %v313
  %352 = vmatprep.subr.bf16.mxu0 0
  %353 = vmatpush1.bf16.msra.mxu0 %v312
  %354 = vmatprep.subr.bf16.mxu0 0
  %355 = vmatpush1.bf16.msra.mxu0 %v311
  %356 = vmatprep.subr.bf16.mxu0 0
  %357 = vmatpush1.bf16.msra.mxu0 %v310
  %358 = vmatprep.subr.bf16.mxu0 0
  %359 = vmatpush2.bf16.msra.mxu0 %v325
  %360 = vmatprep.subr.bf16.mxu0 0
  %361 = vmatpush2.bf16.msra.mxu0 %v324
  %362 = vmatprep.subr.bf16.mxu0 0
  %363 = vmatpush2.bf16.msra.mxu0 %v323
  %364 = vmatprep.subr.bf16.mxu0 0
  %365 = vmatpush2.bf16.msra.mxu0 %v322
  %366 = vmatprep.subr.bf16.mxu0 0
  %367 = vmatpush2.bf16.msra.mxu0 %v321
  %368 = vmatprep.subr.bf16.mxu0 0
  %369 = vmatpush2.bf16.msra.mxu0 %v320
  %370 = vmatprep.subr.bf16.mxu0 0
  %371 = vmatpush2.bf16.msra.mxu0 %v319
  %372 = vmatprep.subr.bf16.mxu0 0
  %373 = vmatpush2.bf16.msra.mxu0 %v318
  %374 = vmatprep.mubr.bf16.mxu0 %v183
  %375 = vmatmul.mubr.bf16.gmra.mxu0 %v182
  %v376 = vpop.f32.mrf.mxu0
  %v377 = vadd.f32 %v84, %v376
  %v378 = vpop.f32.mrf.mxu0
  %v379 = vpop.f32.mrf.mxu0
  %v380 = vadd.f32 %v84, %v379
  %v381 = vpop.f32.mrf.mxu0
  %382 = vmatprep.mubr.bf16.mxu0 %v185
  %383 = vmatmul.mubr.bf16.gmra.mxu0 %v184
  %v384 = vpop.f32.mrf.mxu0
  %v385 = vadd.f32 %v84, %v384
  %v386 = vpop.f32.mrf.mxu0
  %v387 = vpop.f32.mrf.mxu0
  %v388 = vadd.f32 %v84, %v387
  %v389 = vpop.f32.mrf.mxu0
  %390 = vmatprep.mubr.bf16.mxu0 %v187
  %391 = vmatmul.mubr.bf16.gmra.mxu0 %v186
  %v392 = vpop.f32.mrf.mxu0
  %v393 = vadd.f32 %v84, %v392
  %v394 = vpop.f32.mrf.mxu0
  %v395 = vpop.f32.mrf.mxu0
  %v396 = vadd.f32 %v84, %v395
  %v397 = vpop.f32.mrf.mxu0
  %398 = vmatprep.mubr.bf16.mxu0 %v189
  %399 = vmatmul.mubr.bf16.gmra.mxu0 %v188
  %v400 = vpop.f32.mrf.mxu0
  %v401 = vadd.f32 %v84, %v400
  %v402 = vpop.f32.mrf.mxu0
  %v403 = vpop.f32.mrf.mxu0
  %v404 = vadd.f32 %v84, %v403
  %v405 = vpop.f32.mrf.mxu0
  %406 = vmatprep.mubr.bf16.mxu0 %v191
  %407 = vmatmul.mubr.bf16.gmra.mxu0 %v190
  %v408 = vpop.f32.mrf.mxu0
  %v409 = vadd.f32 %v84, %v408
  %v410 = vpop.f32.mrf.mxu0
  %v411 = vpop.f32.mrf.mxu0
  %v412 = vadd.f32 %v84, %v411
  %v413 = vpop.f32.mrf.mxu0
  %414 = vmatprep.mubr.bf16.mxu0 %v193
  %415 = vmatmul.mubr.bf16.gmra.mxu0 %v192
  %v416 = vpop.f32.mrf.mxu0
  %v417 = vadd.f32 %v84, %v416
  %v418 = vpop.f32.mrf.mxu0
  %v419 = vpop.f32.mrf.mxu0
  %v420 = vadd.f32 %v84, %v419
  %v421 = vpop.f32.mrf.mxu0
  %422 = vmatprep.mubr.bf16.mxu0 %v195
  %423 = vmatmul.mubr.bf16.gmra.mxu0 %v194
  %v424 = vpop.f32.mrf.mxu0
  %v425 = vadd.f32 %v84, %v424
  %v426 = vpop.f32.mrf.mxu0
  %v427 = vpop.f32.mrf.mxu0
  %v428 = vadd.f32 %v84, %v427
  %v429 = vpop.f32.mrf.mxu0
  %430 = vmatprep.mubr.bf16.mxu0 %v197
  %431 = vmatmul.mubr.bf16.gmra.mxu0 %v196
  %v432 = vpop.f32.mrf.mxu0
  %v433 = vadd.f32 %v84, %v432
  %v434 = vpop.f32.mrf.mxu0
  %v435 = vpop.f32.mrf.mxu0
  %v436 = vadd.f32 %v84, %v435
  %v437 = vpop.f32.mrf.mxu0
  %438 = vmatprep.mubr.bf16.mxu0 %v199
  %439 = vmatmul.mubr.bf16.gmra.mxu0 %v198
  %v440 = vpop.f32.mrf.mxu0
  %v441 = vadd.f32 %v84, %v440
  %v442 = vpop.f32.mrf.mxu0
  %v443 = vpop.f32.mrf.mxu0
  %v444 = vadd.f32 %v84, %v443
  %v445 = vpop.f32.mrf.mxu0
  %446 = vmatprep.mubr.bf16.mxu0 %v201
  %447 = vmatmul.mubr.bf16.gmra.mxu0 %v200
  %v448 = vpop.f32.mrf.mxu0
  %v449 = vadd.f32 %v84, %v448
  %v450 = vpop.f32.mrf.mxu0
  %v451 = vpop.f32.mrf.mxu0
  %v452 = vadd.f32 %v84, %v451
  %v453 = vpop.f32.mrf.mxu0
  %454 = vmatprep.mubr.bf16.mxu0 %v203
  %455 = vmatmul.mubr.bf16.gmra.mxu0 %v202
  %v456 = vpop.f32.mrf.mxu0
  %v457 = vadd.f32 %v84, %v456
  %v458 = vpop.f32.mrf.mxu0
  %v459 = vpop.f32.mrf.mxu0
  %v460 = vadd.f32 %v84, %v459
  %v461 = vpop.f32.mrf.mxu0
  %462 = vmatprep.mubr.bf16.mxu0 %v205
  %463 = vmatmul.mubr.bf16.gmra.mxu0 %v204
  %v464 = vpop.f32.mrf.mxu0
  %v465 = vadd.f32 %v84, %v464
  %v466 = vpop.f32.mrf.mxu0
  %v467 = vpop.f32.mrf.mxu0
  %v468 = vadd.f32 %v84, %v467
  %v469 = vpop.f32.mrf.mxu0
  %470 = vmatprep.mubr.bf16.mxu0 %v207
  %471 = vmatmul.mubr.bf16.gmra.mxu0 %v206
  %v472 = vpop.f32.mrf.mxu0
  %v473 = vadd.f32 %v84, %v472
  %v474 = vpop.f32.mrf.mxu0
  %v475 = vpop.f32.mrf.mxu0
  %v476 = vadd.f32 %v84, %v475
  %v477 = vpop.f32.mrf.mxu0
  %478 = vmatprep.mubr.bf16.mxu0 %v209
  %479 = vmatmul.mubr.bf16.gmra.mxu0 %v208
  %v480 = vpop.f32.mrf.mxu0
  %v481 = vadd.f32 %v84, %v480
  %v482 = vpop.f32.mrf.mxu0
  %v483 = vpop.f32.mrf.mxu0
  %v484 = vadd.f32 %v84, %v483
  %v485 = vpop.f32.mrf.mxu0
  %486 = vmatprep.mubr.bf16.mxu0 %v211
  %487 = vmatmul.mubr.bf16.gmra.mxu0 %v210
  %v488 = vpop.f32.mrf.mxu0
  %v489 = vadd.f32 %v84, %v488
  %v490 = vpop.f32.mrf.mxu0
  %v491 = vpop.f32.mrf.mxu0
  %v492 = vadd.f32 %v84, %v491
  %v493 = vpop.f32.mrf.mxu0
  %494 = vmatprep.mubr.bf16.mxu0 %v213
  %495 = vmatmul.mubr.bf16.gmra.mxu0 %v212
  %v496 = vpop.f32.mrf.mxu0
  %v497 = vadd.f32 %v84, %v496
  %v498 = vpop.f32.mrf.mxu0
  %v499 = vpop.f32.mrf.mxu0
  %v500 = vadd.f32 %v84, %v499
  %v501 = vpop.f32.mrf.mxu0
  %502 = vdwg.mxu0
  %503 = vst [vmem:[%s3] sm:$0xff] %v377
  %504 = vst [vmem:[%s3 + $0x8] sm:$0xff] %v380
  %505 = vst [vmem:[%s3 + $0x10] sm:$0xff] %v385
  %506 = vst [vmem:[%s3 + $0x18] sm:$0xff] %v388
  %507 = vst [vmem:[%s3 + $0x20] sm:$0xff] %v393
  %508 = vst [vmem:[%s3 + $0x28] sm:$0xff] %v396
  %509 = vst [vmem:[%s3 + $0x30] sm:$0xff] %v401
  %510 = vst [vmem:[%s3 + $0x38] sm:$0xff] %v404
  %511 = vst [vmem:[%s3 + $0x40] sm:$0xff] %v409
  %512 = vst [vmem:[%s3 + $0x48] sm:$0xff] %v412
  %513 = vst [vmem:[%s3 + $0x50] sm:$0xff] %v417
  %514 = vst [vmem:[%s3 + $0x58] sm:$0xff] %v420
  %515 = vst [vmem:[%s3 + $0x60] sm:$0xff] %v425
  %516 = vst [vmem:[%s3 + $0x68] sm:$0xff] %v428
  %517 = vst [vmem:[%s3 + $0x70] sm:$0xff] %v433
  %518 = vst [vmem:[%s3 + $0x78] sm:$0xff] %v436
  %519 = vst [vmem:[%s3 + $0x80] sm:$0xff] %v441
  %520 = vst [vmem:[%s3 + $0x88] sm:$0xff] %v444
  %521 = vst [vmem:[%s3 + $0x90] sm:$0xff] %v449
  %522 = vst [vmem:[%s3 + $0x98] sm:$0xff] %v452
  %523 = vst [vmem:[%s3 + $0xa0] sm:$0xff] %v457
  %524 = vst [vmem:[%s3 + $0xa8] sm:$0xff] %v460
  %525 = vst [vmem:[%s3 + $0xb0] sm:$0xff] %v465
  %526 = vst [vmem:[%s3 + $0xb8] sm:$0xff] %v468
  %527 = vst [vmem:[%s3 + $0xc0] sm:$0xff] %v473
  %528 = vst [vmem:[%s3 + $0xc8] sm:$0xff] %v476
  %529 = vst [vmem:[%s3 + $0xd0] sm:$0xff] %v481
  %530 = vst [vmem:[%s3 + $0xd8] sm:$0xff] %v484
  %531 = vst [vmem:[%s3 + $0xe0] sm:$0xff] %v489
  %532 = vst [vmem:[%s3 + $0xe8] sm:$0xff] %v492
  %533 = vst [vmem:[%s3 + $0xf0] sm:$0xff] %v497
  %534 = vst [vmem:[%s3 + $0xf8] sm:$0xff] %v500
  // Predicated region
  $region14: #{graph_convolution_forward.3} parent=0 // pred_check
    _
  $region15: #{graph_convolution_forward.3} parent=0 // pred_check_branch
    %536 = sbr.rel (0) target = $region17
  $region16: #{graph_convolution_forward.3} parent=0 // pred_region
    _
  $region17: #{graph_convolution_forward.3} parent=0 // pred_fallthru
    _
  // Predicated region
  $region18: #{graph_convolution_forward.3} parent=0 // pred_check
    _
  $region19: #{graph_convolution_forward.3} parent=0 // pred_check_branch
    %538 = sbr.rel (0) target = $region21
  $region20: #{graph_convolution_forward.3} parent=0 // pred_region
    _
  $region21: #{graph_convolution_forward.3} parent=0 // pred_fallthru
    _

// kernel: graph_convolution_forward.2
$region0: #{graph_convolution_forward.2}
  #allocation0 [shape = 'u32[]', space=smem, size = 0x4, offset = 0x4, fixed_abs, tag = 'smem constant byte address 0x4 - core index']
  #allocation1 [shape = 'u32[144,128]{1,0:T(1,128)}', space=vmem, size = 0x12000, scoped, tag = 'internal scratch']
  #allocation2 [shape = 'f32[256,128]{1,0:T(8,128)}', space=vmem, size = 0x20000, scoped, tag = 'scratch operand']
  %s0 = inlined_call_operand.vmem [shape: bf16[256,128], index: 0, kind: input, shape index: {}]
  %s1 = inlined_call_operand.vmem [shape: bf16[128,128], index: 1, kind: input, shape index: {}]
  %s2 = inlined_call_operand.vmem [shape: bf16[256,128], index: 2, kind: output, shape index: {}]
  %s3 = sld [smem:[#allocation0]]
  $region26: #{graph_convolution_forward.2} parent=0
    _
  %s5 = ssub.s32 1, %s3
  %s6 = scalar_select 0, %s5, %s3
  // Predicated region
  $region2: #{graph_convolution_forward.2} parent=0 // pred_check
    _
  $region3: #{graph_convolution_forward.2} parent=0 // pred_check_branch
    %8 = sbr.rel (0) target = $region5
  $region4: #{graph_convolution_forward.2} parent=0 // pred_region
    _
  $region5: #{graph_convolution_forward.2} parent=0 // pred_fallthru
    _
  // Predicated region
  $region6: #{graph_convolution_forward.2} parent=0 // pred_check
    _
  $region7: #{graph_convolution_forward.2} parent=0 // pred_check_branch
    %10 = sbr.rel (0) target = $region9
  $region8: #{graph_convolution_forward.2} parent=0 // pred_region
    _
  $region9: #{graph_convolution_forward.2} parent=0 // pred_fallthru
    _
  %p12 = scmp.eq.s32.totalorder 0, 0
  // Predicated region
  $region10: #{graph_convolution_forward.2} parent=0 // pred_check
    %p13 = pneg %p12
  $region11: #{graph_convolution_forward.2} parent=0 // pred_check_branch
    %15 = sbr.rel (%p13) target = $region13
  $region12: #{graph_convolution_forward.2} parent=0 // pred_region
    %16 = vst [vmem:[#allocation2] sm:$0xff] 0.0
    %17 = vst [vmem:[#allocation2 + $0x8] sm:$0xff] 0.0
    %18 = vst [vmem:[#allocation2 + $0x10] sm:$0xff] 0.0
    %19 = vst [vmem:[#allocation2 + $0x18] sm:$0xff] 0.0
    %20 = vst [vmem:[#allocation2 + $0x20] sm:$0xff] 0.0
    %21 = vst [vmem:[#allocation2 + $0x28] sm:$0xff] 0.0
    %22 = vst [vmem:[#allocation2 + $0x30] sm:$0xff] 0.0
    %23 = vst [vmem:[#allocation2 + $0x38] sm:$0xff] 0.0
    %24 = vst [vmem:[#allocation2 + $0x40] sm:$0xff] 0.0
    %25 = vst [vmem:[#allocation2 + $0x48] sm:$0xff] 0.0
    %26 = vst [vmem:[#allocation2 + $0x50] sm:$0xff] 0.0
    %27 = vst [vmem:[#allocation2 + $0x58] sm:$0xff] 0.0
    %28 = vst [vmem:[#allocation2 + $0x60] sm:$0xff] 0.0
    %29 = vst [vmem:[#allocation2 + $0x68] sm:$0xff] 0.0
    %30 = vst [vmem:[#allocation2 + $0x70] sm:$0xff] 0.0
    %31 = vst [vmem:[#allocation2 + $0x78] sm:$0xff] 0.0
    %32 = vst [vmem:[#allocation2 + $0x80] sm:$0xff] 0.0
    %33 = vst [vmem:[#allocation2 + $0x88] sm:$0xff] 0.0
    %34 = vst [vmem:[#allocation2 + $0x90] sm:$0xff] 0.0
    %35 = vst [vmem:[#allocation2 + $0x98] sm:$0xff] 0.0
    %36 = vst [vmem:[#allocation2 + $0xa0] sm:$0xff] 0.0
    %37 = vst [vmem:[#allocation2 + $0xa8] sm:$0xff] 0.0
    %38 = vst [vmem:[#allocation2 + $0xb0] sm:$0xff] 0.0
    %39 = vst [vmem:[#allocation2 + $0xb8] sm:$0xff] 0.0
    %40 = vst [vmem:[#allocation2 + $0xc0] sm:$0xff] 0.0
    %41 = vst [vmem:[#allocation2 + $0xc8] sm:$0xff] 0.0
    %42 = vst [vmem:[#allocation2 + $0xd0] sm:$0xff] 0.0
    %43 = vst [vmem:[#allocation2 + $0xd8] sm:$0xff] 0.0
    %44 = vst [vmem:[#allocation2 + $0xe0] sm:$0xff] 0.0
    %45 = vst [vmem:[#allocation2 + $0xe8] sm:$0xff] 0.0
    %46 = vst [vmem:[#allocation2 + $0xf0] sm:$0xff] 0.0
    %47 = vst [vmem:[#allocation2 + $0xf8] sm:$0xff] 0.0
  $region13: #{graph_convolution_forward.2} parent=0 // pred_fallthru
    _
  %v48 = vld [vmem:[#allocation2] sm:$0xff]
  %v49 = vld [vmem:[#allocation2 + $0x8] sm:$0xff]
  %v50 = vld [vmem:[#allocation2 + $0x10] sm:$0xff]
  %v51 = vld [vmem:[#allocation2 + $0x18] sm:$0xff]
  %v52 = vld [vmem:[#allocation2 + $0x20] sm:$0xff]
  %v53 = vld [vmem:[#allocation2 + $0x28] sm:$0xff]
  %v54 = vld [vmem:[#allocation2 + $0x30] sm:$0xff]
  %v55 = vld [vmem:[#allocation2 + $0x38] sm:$0xff]
  %v56 = vld [vmem:[#allocation2 + $0x40] sm:$0xff]
  %v57 = vld [vmem:[#allocation2 + $0x48] sm:$0xff]
  %v58 = vld [vmem:[#allocation2 + $0x50] sm:$0xff]
  %v59 = vld [vmem:[#allocation2 + $0x58] sm:$0xff]
  %v60 = vld [vmem:[#allocation2 + $0x60] sm:$0xff]
  %v61 = vld [vmem:[#allocation2 + $0x68] sm:$0xff]
  %v62 = vld [vmem:[#allocation2 + $0x70] sm:$0xff]
  %v63 = vld [vmem:[#allocation2 + $0x78] sm:$0xff]
  %v64 = vld [vmem:[#allocation2 + $0x80] sm:$0xff]
  %v65 = vld [vmem:[#allocation2 + $0x88] sm:$0xff]
  %v66 = vld [vmem:[#allocation2 + $0x90] sm:$0xff]
  %v67 = vld [vmem:[#allocation2 + $0x98] sm:$0xff]
  %v68 = vld [vmem:[#allocation2 + $0xa0] sm:$0xff]
  %v69 = vld [vmem:[#allocation2 + $0xa8] sm:$0xff]
  %v70 = vld [vmem:[#allocation2 + $0xb0] sm:$0xff]
  %v71 = vld [vmem:[#allocation2 + $0xb8] sm:$0xff]
  %v72 = vld [vmem:[#allocation2 + $0xc0] sm:$0xff]
  %v73 = vld [vmem:[#allocation2 + $0xc8] sm:$0xff]
  %v74 = vld [vmem:[#allocation2 + $0xd0] sm:$0xff]
  %v75 = vld [vmem:[#allocation2 + $0xd8] sm:$0xff]
  %v76 = vld [vmem:[#allocation2 + $0xe0] sm:$0xff]
  %v77 = vld [vmem:[#allocation2 + $0xe8] sm:$0xff]
  %v78 = vld [vmem:[#allocation2 + $0xf0] sm:$0xff]
  %v79 = vld [vmem:[#allocation2 + $0xf8] sm:$0xff]
  %v80 = vld [vmem:[%s0] sm:$0xf]
  %v81 = vld [vmem:[%s0 + $0x4] sm:$0xf]
  %v82 = vld [vmem:[%s0 + $0x8] sm:$0xf]
  %v83 = vld [vmem:[%s0 + $0xc] sm:$0xf]
  %v84 = vld [vmem:[%s0 + $0x10] sm:$0xf]
  %v85 = vld [vmem:[%s0 + $0x14] sm:$0xf]
  %v86 = vld [vmem:[%s0 + $0x18] sm:$0xf]
  %v87 = vld [vmem:[%s0 + $0x1c] sm:$0xf]
  %v88 = vld [vmem:[%s0 + $0x20] sm:$0xf]
  %v89 = vld [vmem:[%s0 + $0x24] sm:$0xf]
  %v90 = vld [vmem:[%s0 + $0x28] sm:$0xf]
  %v91 = vld [vmem:[%s0 + $0x2c] sm:$0xf]
  %v92 = vld [vmem:[%s0 + $0x30] sm:$0xf]
  %v93 = vld [vmem:[%s0 + $0x34] sm:$0xf]
  %v94 = vld [vmem:[%s0 + $0x38] sm:$0xf]
  %v95 = vld [vmem:[%s0 + $0x3c] sm:$0xf]
  %v96 = vld [vmem:[%s0 + $0x40] sm:$0xf]
  %v97 = vld [vmem:[%s0 + $0x44] sm:$0xf]
  %v98 = vld [vmem:[%s0 + $0x48] sm:$0xf]
  %v99 = vld [vmem:[%s0 + $0x4c] sm:$0xf]
  %v100 = vld [vmem:[%s0 + $0x50] sm:$0xf]
  %v101 = vld [vmem:[%s0 + $0x54] sm:$0xf]
  %v102 = vld [vmem:[%s0 + $0x58] sm:$0xf]
  %v103 = vld [vmem:[%s0 + $0x5c] sm:$0xf]
  %v104 = vld [vmem:[%s0 + $0x60] sm:$0xf]
  %v105 = vld [vmem:[%s0 + $0x64] sm:$0xf]
  %v106 = vld [vmem:[%s0 + $0x68] sm:$0xf]
  %v107 = vld [vmem:[%s0 + $0x6c] sm:$0xf]
  %v108 = vld [vmem:[%s0 + $0x70] sm:$0xf]
  %v109 = vld [vmem:[%s0 + $0x74] sm:$0xf]
  %v110 = vld [vmem:[%s0 + $0x78] sm:$0xf]
  %v111 = vld [vmem:[%s0 + $0x7c] sm:$0xf]
  %v112 = vld [vmem:[%s1] sm:$0xf]
  %v113 = vld [vmem:[%s1 + $0x4] sm:$0xf]
  %v114 = vld [vmem:[%s1 + $0x8] sm:$0xf]
  %v115 = vld [vmem:[%s1 + $0xc] sm:$0xf]
  %v116 = vld [vmem:[%s1 + $0x10] sm:$0xf]
  %v117 = vld [vmem:[%s1 + $0x14] sm:$0xf]
  %v118 = vld [vmem:[%s1 + $0x18] sm:$0xf]
  %v119 = vld [vmem:[%s1 + $0x1c] sm:$0xf]
  %v120 = vld [vmem:[%s1 + $0x20] sm:$0xf]
  %v121 = vld [vmem:[%s1 + $0x24] sm:$0xf]
  %v122 = vld [vmem:[%s1 + $0x28] sm:$0xf]
  %v123 = vld [vmem:[%s1 + $0x2c] sm:$0xf]
  %v124 = vld [vmem:[%s1 + $0x30] sm:$0xf]
  %v125 = vld [vmem:[%s1 + $0x34] sm:$0xf]
  %v126 = vld [vmem:[%s1 + $0x38] sm:$0xf]
  %v127 = vld [vmem:[%s1 + $0x3c] sm:$0xf]
  %v160 = vunpack.c.l.b16 %v80
  %v161 = vunpack.c.l.b16 %v81
  %v162 = vunpack.c.l.b16 %v82
  %v163 = vunpack.c.l.b16 %v83
  %v164 = vunpack.c.l.b16 %v84
  %v165 = vunpack.c.l.b16 %v85
  %v166 = vunpack.c.l.b16 %v86
  %v167 = vunpack.c.l.b16 %v87
  %v168 = vunpack.c.l.b16 %v88
  %v169 = vunpack.c.l.b16 %v89
  %v170 = vunpack.c.l.b16 %v90
  %v171 = vunpack.c.l.b16 %v91
  %v172 = vunpack.c.l.b16 %v92
  %v173 = vunpack.c.l.b16 %v93
  %v174 = vunpack.c.l.b16 %v94
  %v175 = vunpack.c.l.b16 %v95
  %v176 = vunpack.c.l.b16 %v96
  %v177 = vunpack.c.l.b16 %v97
  %v178 = vunpack.c.l.b16 %v98
  %v179 = vunpack.c.l.b16 %v99
  %v180 = vunpack.c.l.b16 %v100
  %v181 = vunpack.c.l.b16 %v101
  %v182 = vunpack.c.l.b16 %v102
  %v183 = vunpack.c.l.b16 %v103
  %v184 = vunpack.c.l.b16 %v104
  %v185 = vunpack.c.l.b16 %v105
  %v186 = vunpack.c.l.b16 %v106
  %v187 = vunpack.c.l.b16 %v107
  %v188 = vunpack.c.l.b16 %v108
  %v189 = vunpack.c.l.b16 %v109
  %v190 = vunpack.c.l.b16 %v110
  %v191 = vunpack.c.l.b16 %v111
  %v192 = vpack.c.b16 %v161, %v160
  %v193 = vpack.c.b16 %v163, %v162
  %v194 = vpack.c.b16 %v165, %v164
  %v195 = vpack.c.b16 %v167, %v166
  %v196 = vpack.c.b16 %v169, %v168
  %v197 = vpack.c.b16 %v171, %v170
  %v198 = vpack.c.b16 %v173, %v172
  %v199 = vpack.c.b16 %v175, %v174
  %v200 = vpack.c.b16 %v177, %v176
  %v201 = vpack.c.b16 %v179, %v178
  %v202 = vpack.c.b16 %v181, %v180
  %v203 = vpack.c.b16 %v183, %v182
  %v204 = vpack.c.b16 %v185, %v184
  %v205 = vpack.c.b16 %v187, %v186
  %v206 = vpack.c.b16 %v189, %v188
  %v207 = vpack.c.b16 %v191, %v190
  %v240 = vunpack.c.l.b16 %v112
  %v241 = vunpack.c.l.b16 %v113
  %v242 = vunpack.c.l.b16 %v114
  %v243 = vunpack.c.l.b16 %v115
  %v244 = vunpack.c.l.b16 %v116
  %v245 = vunpack.c.l.b16 %v117
  %v246 = vunpack.c.l.b16 %v118
  %v247 = vunpack.c.l.b16 %v119
  %v248 = vunpack.c.l.b16 %v120
  %v249 = vunpack.c.l.b16 %v121
  %v250 = vunpack.c.l.b16 %v122
  %v251 = vunpack.c.l.b16 %v123
  %v252 = vunpack.c.l.b16 %v124
  %v253 = vunpack.c.l.b16 %v125
  %v254 = vunpack.c.l.b16 %v126
  %v255 = vunpack.c.l.b16 %v127
  %v256 = vpack.c.b16 %v241, %v240
  %v257 = vpack.c.b16 %v243, %v242
  %v258 = vpack.c.b16 %v245, %v244
  %v259 = vpack.c.b16 %v247, %v246
  %v260 = vpack.c.b16 %v249, %v248
  %v261 = vpack.c.b16 %v251, %v250
  %v262 = vpack.c.b16 %v253, %v252
  %v263 = vpack.c.b16 %v255, %v254
  %272 = vmatprep.subr.bf16.mxu0 0
  %273 = vmatpush1.bf16.msra.mxu0 %v263
  %274 = vmatprep.subr.bf16.mxu0 0
  %275 = vmatpush1.bf16.msra.mxu0 %v262
  %276 = vmatprep.subr.bf16.mxu0 0
  %277 = vmatpush1.bf16.msra.mxu0 %v261
  %278 = vmatprep.subr.bf16.mxu0 0
  %279 = vmatpush1.bf16.msra.mxu0 %v260
  %280 = vmatprep.subr.bf16.mxu0 0
  %281 = vmatpush1.bf16.msra.mxu0 %v259
  %282 = vmatprep.subr.bf16.mxu0 0
  %283 = vmatpush1.bf16.msra.mxu0 %v258
  %284 = vmatprep.subr.bf16.mxu0 0
  %285 = vmatpush1.bf16.msra.mxu0 %v257
  %286 = vmatprep.subr.bf16.mxu0 0
  %287 = vmatpush1.bf16.msra.mxu0 %v256
  %288 = vmatprep.subr.bf16.mxu0 0
  %289 = vmatpush2.bf16.msra.mxu0 0
  %290 = vmatprep.subr.bf16.mxu0 0
  %291 = vmatpush2.bf16.msra.mxu0 0
  %292 = vmatprep.subr.bf16.mxu0 0
  %293 = vmatpush2.bf16.msra.mxu0 0
  %294 = vmatprep.subr.bf16.mxu0 0
  %295 = vmatpush2.bf16.msra.mxu0 0
  %296 = vmatprep.subr.bf16.mxu0 0
  %297 = vmatpush2.bf16.msra.mxu0 0
  %298 = vmatprep.subr.bf16.mxu0 0
  %299 = vmatpush2.bf16.msra.mxu0 0
  %300 = vmatprep.subr.bf16.mxu0 0
  %301 = vmatpush2.bf16.msra.mxu0 0
  %302 = vmatprep.subr.bf16.mxu0 0
  %303 = vmatpush2.bf16.msra.mxu0 0
  %304 = vmatprep.mubr.bf16.mxu0 0
  %305 = vmatmul.mubr.bf16.gmra.mxu0 %v192
  %v306 = vpop.f32.mrf.mxu0
  %v307 = vadd.f32 0.0, %v306
  %v308 = vpop.f32.mrf.mxu0
  %v309 = vpop.f32.mrf.mxu0
  %v310 = vadd.f32 0.0, %v309
  %v311 = vpop.f32.mrf.mxu0
  %312 = vmatprep.mubr.bf16.mxu0 0
  %313 = vmatmul.mubr.bf16.gmra.mxu0 %v193
  %v314 = vpop.f32.mrf.mxu0
  %v315 = vadd.f32 0.0, %v314
  %v316 = vpop.f32.mrf.mxu0
  %v317 = vpop.f32.mrf.mxu0
  %v318 = vadd.f32 0.0, %v317
  %v319 = vpop.f32.mrf.mxu0
  %320 = vmatprep.mubr.bf16.mxu0 0
  %321 = vmatmul.mubr.bf16.gmra.mxu0 %v194
  %v322 = vpop.f32.mrf.mxu0
  %v323 = vadd.f32 0.0, %v322
  %v324 = vpop.f32.mrf.mxu0
  %v325 = vpop.f32.mrf.mxu0
  %v326 = vadd.f32 0.0, %v325
  %v327 = vpop.f32.mrf.mxu0
  %328 = vmatprep.mubr.bf16.mxu0 0
  %329 = vmatmul.mubr.bf16.gmra.mxu0 %v195
  %v330 = vpop.f32.mrf.mxu0
  %v331 = vadd.f32 0.0, %v330
  %v332 = vpop.f32.mrf.mxu0
  %v333 = vpop.f32.mrf.mxu0
  %v334 = vadd.f32 0.0, %v333
  %v335 = vpop.f32.mrf.mxu0
  %336 = vmatprep.mubr.bf16.mxu0 0
  %337 = vmatmul.mubr.bf16.gmra.mxu0 %v196
  %v338 = vpop.f32.mrf.mxu0
  %v339 = vadd.f32 0.0, %v338
  %v340 = vpop.f32.mrf.mxu0
  %v341 = vpop.f32.mrf.mxu0
  %v342 = vadd.f32 0.0, %v341
  %v343 = vpop.f32.mrf.mxu0
  %344 = vmatprep.mubr.bf16.mxu0 0
  %345 = vmatmul.mubr.bf16.gmra.mxu0 %v197
  %v346 = vpop.f32.mrf.mxu0
  %v347 = vadd.f32 0.0, %v346
  %v348 = vpop.f32.mrf.mxu0
  %v349 = vpop.f32.mrf.mxu0
  %v350 = vadd.f32 0.0, %v349
  %v351 = vpop.f32.mrf.mxu0
  %352 = vmatprep.mubr.bf16.mxu0 0
  %353 = vmatmul.mubr.bf16.gmra.mxu0 %v198
  %v354 = vpop.f32.mrf.mxu0
  %v355 = vadd.f32 0.0, %v354
  %v356 = vpop.f32.mrf.mxu0
  %v357 = vpop.f32.mrf.mxu0
  %v358 = vadd.f32 0.0, %v357
  %v359 = vpop.f32.mrf.mxu0
  %360 = vmatprep.mubr.bf16.mxu0 0
  %361 = vmatmul.mubr.bf16.gmra.mxu0 %v199
  %v362 = vpop.f32.mrf.mxu0
  %v363 = vadd.f32 0.0, %v362
  %v364 = vpop.f32.mrf.mxu0
  %v365 = vpop.f32.mrf.mxu0
  %v366 = vadd.f32 0.0, %v365
  %v367 = vpop.f32.mrf.mxu0
  %368 = vmatprep.mubr.bf16.mxu0 0
  %369 = vmatmul.mubr.bf16.gmra.mxu0 %v200
  %v370 = vpop.f32.mrf.mxu0
  %v371 = vadd.f32 0.0, %v370
  %v372 = vpop.f32.mrf.mxu0
  %v373 = vpop.f32.mrf.mxu0
  %v374 = vadd.f32 0.0, %v373
  %v375 = vpop.f32.mrf.mxu0
  %376 = vmatprep.mubr.bf16.mxu0 0
  %377 = vmatmul.mubr.bf16.gmra.mxu0 %v201
  %v378 = vpop.f32.mrf.mxu0
  %v379 = vadd.f32 0.0, %v378
  %v380 = vpop.f32.mrf.mxu0
  %v381 = vpop.f32.mrf.mxu0
  %v382 = vadd.f32 0.0, %v381
  %v383 = vpop.f32.mrf.mxu0
  %384 = vmatprep.mubr.bf16.mxu0 0
  %385 = vmatmul.mubr.bf16.gmra.mxu0 %v202
  %v386 = vpop.f32.mrf.mxu0
  %v387 = vadd.f32 0.0, %v386
  %v388 = vpop.f32.mrf.mxu0
  %v389 = vpop.f32.mrf.mxu0
  %v390 = vadd.f32 0.0, %v389
  %v391 = vpop.f32.mrf.mxu0
  %392 = vmatprep.mubr.bf16.mxu0 0
  %393 = vmatmul.mubr.bf16.gmra.mxu0 %v203
  %v394 = vpop.f32.mrf.mxu0
  %v395 = vadd.f32 0.0, %v394
  %v396 = vpop.f32.mrf.mxu0
  %v397 = vpop.f32.mrf.mxu0
  %v398 = vadd.f32 0.0, %v397
  %v399 = vpop.f32.mrf.mxu0
  %400 = vmatprep.mubr.bf16.mxu0 0
  %401 = vmatmul.mubr.bf16.gmra.mxu0 %v204
  %v402 = vpop.f32.mrf.mxu0
  %v403 = vadd.f32 0.0, %v402
  %v404 = vpop.f32.mrf.mxu0
  %v405 = vpop.f32.mrf.mxu0
  %v406 = vadd.f32 0.0, %v405
  %v407 = vpop.f32.mrf.mxu0
  %408 = vmatprep.mubr.bf16.mxu0 0
  %409 = vmatmul.mubr.bf16.gmra.mxu0 %v205
  %v410 = vpop.f32.mrf.mxu0
  %v411 = vadd.f32 0.0, %v410
  %v412 = vpop.f32.mrf.mxu0
  %v413 = vpop.f32.mrf.mxu0
  %v414 = vadd.f32 0.0, %v413
  %v415 = vpop.f32.mrf.mxu0
  %416 = vmatprep.mubr.bf16.mxu0 0
  %417 = vmatmul.mubr.bf16.gmra.mxu0 %v206
  %v418 = vpop.f32.mrf.mxu0
  %v419 = vadd.f32 0.0, %v418
  %v420 = vpop.f32.mrf.mxu0
  %v421 = vpop.f32.mrf.mxu0
  %v422 = vadd.f32 0.0, %v421
  %v423 = vpop.f32.mrf.mxu0
  %424 = vmatprep.mubr.bf16.mxu0 0
  %425 = vmatmul.mubr.bf16.gmra.mxu0 %v207
  %v426 = vpop.f32.mrf.mxu0
  %v427 = vadd.f32 0.0, %v426
  %v428 = vpop.f32.mrf.mxu0
  %v429 = vpop.f32.mrf.mxu0
  %v430 = vadd.f32 0.0, %v429
  %v431 = vpop.f32.mrf.mxu0
  %432 = vdwg.mxu0
  %v433 = vadd.f32 %v48, %v307
  %v434 = vadd.f32 %v49, %v310
  %v435 = vadd.f32 %v50, %v315
  %v436 = vadd.f32 %v51, %v318
  %v437 = vadd.f32 %v52, %v323
  %v438 = vadd.f32 %v53, %v326
  %v439 = vadd.f32 %v54, %v331
  %v440 = vadd.f32 %v55, %v334
  %v441 = vadd.f32 %v56, %v339
  %v442 = vadd.f32 %v57, %v342
  %v443 = vadd.f32 %v58, %v347
  %v444 = vadd.f32 %v59, %v350
  %v445 = vadd.f32 %v60, %v355
  %v446 = vadd.f32 %v61, %v358
  %v447 = vadd.f32 %v62, %v363
  %v448 = vadd.f32 %v63, %v366
  %v449 = vadd.f32 %v64, %v371
  %v450 = vadd.f32 %v65, %v374
  %v451 = vadd.f32 %v66, %v379
  %v452 = vadd.f32 %v67, %v382
  %v453 = vadd.f32 %v68, %v387
  %v454 = vadd.f32 %v69, %v390
  %v455 = vadd.f32 %v70, %v395
  %v456 = vadd.f32 %v71, %v398
  %v457 = vadd.f32 %v72, %v403
  %v458 = vadd.f32 %v73, %v406
  %v459 = vadd.f32 %v74, %v411
  %v460 = vadd.f32 %v75, %v414
  %v461 = vadd.f32 %v76, %v419
  %v462 = vadd.f32 %v77, %v422
  %v463 = vadd.f32 %v78, %v427
  %v464 = vadd.f32 %v79, %v430
  %465 = vst [vmem:[#allocation2] sm:$0xff] %v433
  %466 = vst [vmem:[#allocation2 + $0x8] sm:$0xff] %v434
  %467 = vst [vmem:[#allocation2 + $0x10] sm:$0xff] %v435
  %468 = vst [vmem:[#allocation2 + $0x18] sm:$0xff] %v436
  %469 = vst [vmem:[#allocation2 + $0x20] sm:$0xff] %v437
  %470 = vst [vmem:[#allocation2 + $0x28] sm:$0xff] %v438
  %471 = vst [vmem:[#allocation2 + $0x30] sm:$0xff] %v439
  %472 = vst [vmem:[#allocation2 + $0x38] sm:$0xff] %v440
  %473 = vst [vmem:[#allocation2 + $0x40] sm:$0xff] %v441
  %474 = vst [vmem:[#allocation2 + $0x48] sm:$0xff] %v442
  %475 = vst [vmem:[#allocation2 + $0x50] sm:$0xff] %v443
  %476 = vst [vmem:[#allocation2 + $0x58] sm:$0xff] %v444
  %477 = vst [vmem:[#allocation2 + $0x60] sm:$0xff] %v445
  %478 = vst [vmem:[#allocation2 + $0x68] sm:$0xff] %v446
  %479 = vst [vmem:[#allocation2 + $0x70] sm:$0xff] %v447
  %480 = vst [vmem:[#allocation2 + $0x78] sm:$0xff] %v448
  %481 = vst [vmem:[#allocation2 + $0x80] sm:$0xff] %v449
  %482 = vst [vmem:[#allocation2 + $0x88] sm:$0xff] %v450
  %483 = vst [vmem:[#allocation2 + $0x90] sm:$0xff] %v451
  %484 = vst [vmem:[#allocation2 + $0x98] sm:$0xff] %v452
  %485 = vst [vmem:[#allocation2 + $0xa0] sm:$0xff] %v453
  %486 = vst [vmem:[#allocation2 + $0xa8] sm:$0xff] %v454
  %487 = vst [vmem:[#allocation2 + $0xb0] sm:$0xff] %v455
  %488 = vst [vmem:[#allocation2 + $0xb8] sm:$0xff] %v456
  %489 = vst [vmem:[#allocation2 + $0xc0] sm:$0xff] %v457
  %490 = vst [vmem:[#allocation2 + $0xc8] sm:$0xff] %v458
  %491 = vst [vmem:[#allocation2 + $0xd0] sm:$0xff] %v459
  %492 = vst [vmem:[#allocation2 + $0xd8] sm:$0xff] %v460
  %493 = vst [vmem:[#allocation2 + $0xe0] sm:$0xff] %v461
  %494 = vst [vmem:[#allocation2 + $0xe8] sm:$0xff] %v462
  %495 = vst [vmem:[#allocation2 + $0xf0] sm:$0xff] %v463
  %496 = vst [vmem:[#allocation2 + $0xf8] sm:$0xff] %v464
  // Predicated region
  $region14: #{graph_convolution_forward.2} parent=0 // pred_check
    %p497 = pneg %p12
  $region15: #{graph_convolution_forward.2} parent=0 // pred_check_branch
    %499 = sbr.rel (%p497) target = $region17
  $region16: #{graph_convolution_forward.2} parent=0 // pred_region
    %v500 = vld [vmem:[#allocation2] sm:$0xff]
    %v501 = vld [vmem:[#allocation2 + $0x8] sm:$0xff]
    %v502 = vld [vmem:[#allocation2 + $0x10] sm:$0xff]
    %v503 = vld [vmem:[#allocation2 + $0x18] sm:$0xff]
    %v504 = vld [vmem:[#allocation2 + $0x20] sm:$0xff]
    %v505 = vld [vmem:[#allocation2 + $0x28] sm:$0xff]
    %v506 = vld [vmem:[#allocation2 + $0x30] sm:$0xff]
    %v507 = vld [vmem:[#allocation2 + $0x38] sm:$0xff]
    %v508 = vld [vmem:[#allocation2 + $0x40] sm:$0xff]
    %v509 = vld [vmem:[#allocation2 + $0x48] sm:$0xff]
    %v510 = vld [vmem:[#allocation2 + $0x50] sm:$0xff]
    %v511 = vld [vmem:[#allocation2 + $0x58] sm:$0xff]
    %v512 = vld [vmem:[#allocation2 + $0x60] sm:$0xff]
    %v513 = vld [vmem:[#allocation2 + $0x68] sm:$0xff]
    %v514 = vld [vmem:[#allocation2 + $0x70] sm:$0xff]
    %v515 = vld [vmem:[#allocation2 + $0x78] sm:$0xff]
    %v516 = vld [vmem:[#allocation2 + $0x80] sm:$0xff]
    %v517 = vld [vmem:[#allocation2 + $0x88] sm:$0xff]
    %v518 = vld [vmem:[#allocation2 + $0x90] sm:$0xff]
    %v519 = vld [vmem:[#allocation2 + $0x98] sm:$0xff]
    %v520 = vld [vmem:[#allocation2 + $0xa0] sm:$0xff]
    %v521 = vld [vmem:[#allocation2 + $0xa8] sm:$0xff]
    %v522 = vld [vmem:[#allocation2 + $0xb0] sm:$0xff]
    %v523 = vld [vmem:[#allocation2 + $0xb8] sm:$0xff]
    %v524 = vld [vmem:[#allocation2 + $0xc0] sm:$0xff]
    %v525 = vld [vmem:[#allocation2 + $0xc8] sm:$0xff]
    %v526 = vld [vmem:[#allocation2 + $0xd0] sm:$0xff]
    %v527 = vld [vmem:[#allocation2 + $0xd8] sm:$0xff]
    %v528 = vld [vmem:[#allocation2 + $0xe0] sm:$0xff]
    %v529 = vld [vmem:[#allocation2 + $0xe8] sm:$0xff]
    %v530 = vld [vmem:[#allocation2 + $0xf0] sm:$0xff]
    %v531 = vld [vmem:[#allocation2 + $0xf8] sm:$0xff]
    %v532 = vpack.c.bf16 %v501, %v500
    %v533 = vpack.c.bf16 %v503, %v502
    %v534 = vpack.c.bf16 %v505, %v504
    %v535 = vpack.c.bf16 %v507, %v506
    %v536 = vpack.c.bf16 %v509, %v508
    %v537 = vpack.c.bf16 %v511, %v510
    %v538 = vpack.c.bf16 %v513, %v512
    %v539 = vpack.c.bf16 %v515, %v514
    %v540 = vpack.c.bf16 %v517, %v516
    %v541 = vpack.c.bf16 %v519, %v518
    %v542 = vpack.c.bf16 %v521, %v520
    %v543 = vpack.c.bf16 %v523, %v522
    %v544 = vpack.c.bf16 %v525, %v524
    %v545 = vpack.c.bf16 %v527, %v526
    %v546 = vpack.c.bf16 %v529, %v528
    %v547 = vpack.c.bf16 %v531, %v530
    %v564 = vunpack.c.l.b16 %v532
    %v565 = vunpack.c.h.b16 %v532
    %v566 = vunpack.c.l.b16 %v533
    %v567 = vunpack.c.h.b16 %v533
    %v568 = vunpack.c.l.b16 %v534
    %v569 = vunpack.c.h.b16 %v534
    %v570 = vunpack.c.l.b16 %v535
    %v571 = vunpack.c.h.b16 %v535
    %v572 = vunpack.c.l.b16 %v536
    %v573 = vunpack.c.h.b16 %v536
    %v574 = vunpack.c.l.b16 %v537
    %v575 = vunpack.c.h.b16 %v537
    %v576 = vunpack.c.l.b16 %v538
    %v577 = vunpack.c.h.b16 %v538
    %v578 = vunpack.c.l.b16 %v539
    %v579 = vunpack.c.h.b16 %v539
    %v580 = vunpack.c.l.b16 %v540
    %v581 = vunpack.c.h.b16 %v540
    %v582 = vunpack.c.l.b16 %v541
    %v583 = vunpack.c.h.b16 %v541
    %v584 = vunpack.c.l.b16 %v542
    %v585 = vunpack.c.h.b16 %v542
    %v586 = vunpack.c.l.b16 %v543
    %v587 = vunpack.c.h.b16 %v543
    %v588 = vunpack.c.l.b16 %v544
    %v589 = vunpack.c.h.b16 %v544
    %v590 = vunpack.c.l.b16 %v545
    %v591 = vunpack.c.h.b16 %v545
    %v592 = vunpack.c.l.b16 %v546
    %v593 = vunpack.c.h.b16 %v546
    %v594 = vunpack.c.l.b16 %v547
    %v595 = vunpack.c.h.b16 %v547
    %v596 = vpack.c.b16 %v564, %v564
    %v597 = vpack.c.b16 %v565, %v565
    %v598 = vpack.c.b16 %v566, %v566
    %v599 = vpack.c.b16 %v567, %v567
    %v600 = vpack.c.b16 %v568, %v568
    %v601 = vpack.c.b16 %v569, %v569
    %v602 = vpack.c.b16 %v570, %v570
    %v603 = vpack.c.b16 %v571, %v571
    %v604 = vpack.c.b16 %v572, %v572
    %v605 = vpack.c.b16 %v573, %v573
    %v606 = vpack.c.b16 %v574, %v574
    %v607 = vpack.c.b16 %v575, %v575
    %v608 = vpack.c.b16 %v576, %v576
    %v609 = vpack.c.b16 %v577, %v577
    %v610 = vpack.c.b16 %v578, %v578
    %v611 = vpack.c.b16 %v579, %v579
    %v612 = vpack.c.b16 %v580, %v580
    %v613 = vpack.c.b16 %v581, %v581
    %v614 = vpack.c.b16 %v582, %v582
    %v615 = vpack.c.b16 %v583, %v583
    %v616 = vpack.c.b16 %v584, %v584
    %v617 = vpack.c.b16 %v585, %v585
    %v618 = vpack.c.b16 %v586, %v586
    %v619 = vpack.c.b16 %v587, %v587
    %v620 = vpack.c.b16 %v588, %v588
    %v621 = vpack.c.b16 %v589, %v589
    %v622 = vpack.c.b16 %v590, %v590
    %v623 = vpack.c.b16 %v591, %v591
    %v624 = vpack.c.b16 %v592, %v592
    %v625 = vpack.c.b16 %v593, %v593
    %v626 = vpack.c.b16 %v594, %v594
    %v627 = vpack.c.b16 %v595, %v595
    %660 = vst [vmem:[%s2] sm:$0xf] %v596
    %661 = vst [vmem:[%s2 + $0x4] sm:$0xf] %v597
    %662 = vst [vmem:[%s2 + $0x8] sm:$0xf] %v598
    %663 = vst [vmem:[%s2 + $0xc] sm:$0xf] %v599
    %664 = vst [vmem:[%s2 + $0x10] sm:$0xf] %v600
    %665 = vst [vmem:[%s2 + $0x14] sm:$0xf] %v601
    %666 = vst [vmem:[%s2 + $0x18] sm:$0xf] %v602
    %667 = vst [vmem:[%s2 + $0x1c] sm:$0xf] %v603
    %668 = vst [vmem:[%s2 + $0x20] sm:$0xf] %v604
    %669 = vst [vmem:[%s2 + $0x24] sm:$0xf] %v605
    %670 = vst [vmem:[%s2 + $0x28] sm:$0xf] %v606
    %671 = vst [vmem:[%s2 + $0x2c] sm:$0xf] %v607
    %672 = vst [vmem:[%s2 + $0x30] sm:$0xf] %v608
    %673 = vst [vmem:[%s2 + $0x34] sm:$0xf] %v609
    %674 = vst [vmem:[%s2 + $0x38] sm:$0xf] %v610
    %675 = vst [vmem:[%s2 + $0x3c] sm:$0xf] %v611
    %676 = vst [vmem:[%s2 + $0x40] sm:$0xf] %v612
    %677 = vst [vmem:[%s2 + $0x44] sm:$0xf] %v613
    %678 = vst [vmem:[%s2 + $0x48] sm:$0xf] %v614
    %679 = vst [vmem:[%s2 + $0x4c] sm:$0xf] %v615
    %680 = vst [vmem:[%s2 + $0x50] sm:$0xf] %v616
    %681 = vst [vmem:[%s2 + $0x54] sm:$0xf] %v617
    %682 = vst [vmem:[%s2 + $0x58] sm:$0xf] %v618
    %683 = vst [vmem:[%s2 + $0x5c] sm:$0xf] %v619
    %684 = vst [vmem:[%s2 + $0x60] sm:$0xf] %v620
    %685 = vst [vmem:[%s2 + $0x64] sm:$0xf] %v621
    %686 = vst [vmem:[%s2 + $0x68] sm:$0xf] %v622
    %687 = vst [vmem:[%s2 + $0x6c] sm:$0xf] %v623
    %688 = vst [vmem:[%s2 + $0x70] sm:$0xf] %v624
    %689 = vst [vmem:[%s2 + $0x74] sm:$0xf] %v625
    %690 = vst [vmem:[%s2 + $0x78] sm:$0xf] %v626
    %691 = vst [vmem:[%s2 + $0x7c] sm:$0xf] %v627
  $region17: #{graph_convolution_forward.2} parent=0 // pred_fallthru
    _
  // Predicated region
  $region18: #{graph_convolution_forward.2} parent=0 // pred_check
    _
  $region19: #{graph_convolution_forward.2} parent=0 // pred_check_branch
    %693 = sbr.rel (0) target = $region21
  $region20: #{graph_convolution_forward.2} parent=0 // pred_region
    _
  $region21: #{graph_convolution_forward.2} parent=0 // pred_fallthru
    _
  // Predicated region
  $region22: #{graph_convolution_forward.2} parent=0 // pred_check
    _
  $region23: #{graph_convolution_forward.2} parent=0 // pred_check_branch
    %695 = sbr.rel (0) target = $region25
  $region24: #{graph_convolution_forward.2} parent=0 // pred_region
    _
  $region25: #{graph_convolution_forward.2} parent=0 // pred_fallthru
    _

</llo_original>
